<compile_context>
chip_gen: v5e
topology: v5e:2x2
jax: 0.10.0
libtpu: 0.0.40
codegen_flags: <defaults>
</compile_context>

<pallas_src>
import jax
import jax.numpy as jnp
from jax.experimental import pallas as pl
from jax.experimental.pallas import tpu as pltpu

EPS = 1e-5
H1, H2 = 128, 256
LANE = 128

# Trace-time (static B) thresholds for the large-batch code paths.
FOLD_BN_MIN_BATCH = 256    # fold BN normalize into the next matmul when 2*B*H > H_in*H_out
MXU_STATS_MIN_BATCH = 256  # compute column sums on the MXU instead of VALU/XLU reductions


def _bn_stats(h, inv_b, use_mxu):
    """Batch mean and 1/sqrt(var+eps) of h (B, H), single fused pass, f32 math."""
    if use_mxu:
        B, H = h.shape
        ones = jnp.ones((1, B), jnp.float32)
        both = jnp.concatenate([h, h * h], axis=1)              # (B, 2H), H % 128 == 0
        sums = jnp.dot(ones, both, preferred_element_type=jnp.float32)
        s, ss = sums[:, :H], sums[:, H:]
    else:
        s = jnp.sum(h, axis=0, keepdims=True)
        ss = jnp.sum(h * h, axis=0, keepdims=True)
    mu = s * inv_b
    var = jnp.maximum(ss * inv_b - mu * mu, 0.0)                 # guard one-pass variance
    return mu, jax.lax.rsqrt(var + EPS)


def _bn_folded_linear(h, mu, inv_std, w_ref, b_row, mm_dtype):
    """dot((h - mu)*inv_std, W) + b  ==  dot(h, diag(inv_std)@W) + (b - (mu*inv_std)@W).

    Weight scaling and the shift matvec are done in f32 (bf16 cancellation caveat);
    only the big B x H_in x H_out matmul runs with mm_dtype operands.
    """
    w_f32 = w_ref[...].astype(jnp.float32)                       # (H_in, H_out)
    w_scaled = inv_std.reshape(-1, 1) * w_f32                    # scale rows by inv_std
    shift = jnp.dot(mu * inv_std, w_f32, preferred_element_type=jnp.float32)  # (1, H_out)
    return (jnp.dot(h.astype(mm_dtype), w_scaled.astype(mm_dtype),
                    preferred_element_type=jnp.float32)
            + (b_row - shift))


def _make_kernel(fold_bn, mxu_stats):
    def kernel(x_ref, w1_ref, b1_ref, w2_ref, b2_ref, w3_ref, b3_ref, o_ref):
        inv_b = jnp.float32(1.0 / x_ref.shape[0])
        mm_dtype = w1_ref.dtype   # f32 or bf16 operands; accumulation always f32

        # ---- Linear(state_length_padded, 128) ----
        h = jnp.dot(x_ref[...].astype(mm_dtype), w1_ref[...],
                    preferred_element_type=jnp.float32) + b1_ref[...]

        # ---- BatchNorm1d(128) (gamma/beta folded into W2/b2) + Linear(128, 256) ----
        mu, inv_std = _bn_stats(h, inv_b, mxu_stats)
        if fold_bn:
            h = _bn_folded_linear(h, mu, inv_std, w2_ref, b2_ref[...], mm_dtype)
        else:
            h = (h - mu) * inv_std
            h = jnp.dot(h.astype(mm_dtype), w2_ref[...],
                        preferred_element_type=jnp.float32) + b2_ref[...]

        # ---- BatchNorm1d(256) (gamma/beta folded into W3/b3) + Linear(256, A_padded) ----
        mu, inv_std = _bn_stats(h, inv_b, mxu_stats)
        if fold_bn:
            out = _bn_folded_linear(h, mu, inv_std, w3_ref, b3_ref[...], mm_dtype)
        else:
            h = (h - mu) * inv_std
            out = jnp.dot(h.astype(mm_dtype), w3_ref[...],
                          preferred_element_type=jnp.float32) + b3_ref[...]

        o_ref[...] = out.astype(o_ref.dtype)
    return kernel


def _vmem_capacity_bytes():
    try:
        return int(pltpu.get_tpu_info().vmem_capacity_bytes)
    except Exception:
        return 64 << 20   # conservative fallback: v7x per-TensorCore capacity


def prepare_params(params, *, matmul_dtype=jnp.bfloat16):
    """One-time (per parameter update) preparation:
       - transpose Linear weights to [in, out]
       - fold BN gamma/beta into the following Linear
       - zero-pad state_length and the final output dim to multiples of 128 (lane-dense)
       - cast matmul operands to bf16 by default (good on v5e/v6e/v7x MXUs; f32 accumulate)."""
    w1t = params["w1"].T                                   # [S, 128]
    w2t = params["g1"][:, None] * params["w2"].T           # [128, 256], BN1 gamma folded
    b2f = params["b2"] + params["be1"] @ params["w2"].T    # [256],      BN1 beta  folded
    w3t = params["g2"][:, None] * params["w3"].T           # [256, A],   BN2 gamma folded
    b3f = params["b3"] + params["be2"] @ params["w3"].T    # [A],        BN2 beta  folded

    state_length = w1t.shape[0]
    s_pad = (-state_length) % LANE
    w1p = jnp.pad(w1t, ((0, s_pad), (0, 0)))               # zero rows <-> zero-padded x cols

    action_length = w3t.shape[1]
    n_pad = (-action_length) % LANE
    w3p = jnp.pad(w3t, ((0, 0), (0, n_pad)))
    b3p = jnp.pad(b3f, (0, n_pad))

    row = lambda v: v.reshape(1, -1).astype(jnp.float32)    # biases stay f32
    return {
        "w1": w1p.astype(matmul_dtype), "b1": row(params["b1"]),
        "w2": w2t.astype(matmul_dtype), "b2": row(b2f),
        "w3": w3p.astype(matmul_dtype), "b3": row(b3p),
        "state_length": state_length,
        "state_padded": state_length + s_pad,
        "action_length": action_length,
    }


def dqn_forward(x, prep, *, slice_output=True):
    """x: [B, state_length] float32. prep: output of prepare_params().
    slice_output=False returns the lane-padded (B, n_out) array (skip one HBM copy and
    gather Q(s,a) directly from the padded output downstream)."""
    B, S = x.shape
    assert S == prep["state_length"]
    s_padded = prep["state_padded"]
    if S != s_padded:
        x = jnp.pad(x, ((0, 0), (0, s_padded - S)))
    n_out = prep["w3"].shape[1]

    # Explicit VMEM budget (gridless, no double-buffering): activations + weights + slack,
    # clamped to 80% of this chip's physical per-core VMEM (64 MiB v7x, 128 MiB v5e/v6e).
    w_itemsize = jnp.dtype(prep["w1"].dtype).itemsize
    act_bytes = B * (s_padded + 2 * H1 + 2 * H2 + n_out) * 4     # f32 intermediates
    w_bytes = (prep["w1"].size + prep["w2"].size + prep["w3"].size) * w_itemsize
    needed = act_bytes + w_bytes + (2 << 20)
    vmem_limit = int(min(max(needed, 16 << 20), int(0.8 * _vmem_capacity_bytes())))
    # TODO(synk): for large replay batches (activations beyond ~20-24 MiB on v7x, ~2x that
    # on v5e/v6e) tile B on a grid (512-1024-row tiles, batch axis "arbitrary") with a
    # two-pass BN accumulating sum / sum-of-squares in VMEM scratch; on v7x additionally
    # consider a core-split axis with partial BN sums combined via shared VMEM + core_barrier,
    # since a batch-only "arbitrary" axis pins the kernel to one of the two TensorCores.
    # TODO(synk): padding B to a multiple of 16 (bf16 vreg packing) would require masking
    # the padded rows out of the BN statistics; not done here.

    fold_bn = B >= FOLD_BN_MIN_BATCH      # static (trace-time) path selection
    mxu_stats = B >= MXU_STATS_MIN_BATCH

    vmem = pl.BlockSpec(memory_space=pltpu.MemorySpace.VMEM)
    args = (x, prep["w1"], prep["b1"], prep["w2"], prep["b2"], prep["w3"], prep["b3"])

    out_padded = pl.pallas_call(
        _make_kernel(fold_bn, mxu_stats),
        out_shape=jax.ShapeDtypeStruct((B, n_out), jnp.float32),
        in_specs=[vmem] * len(args),
        out_specs=vmem,
        compiler_params=pltpu.CompilerParams(vmem_limit_bytes=vmem_limit),
    )(*args)
    if slice_output:
        return out_padded[:, :prep["action_length"]]
    return out_padded


def init_params(key, state_length, action_length):
    """PyTorch-style init: Linear U[-1/sqrt(fan_in), +1/sqrt(fan_in)], BN gamma=1, beta=0."""
    def linear(k, fan_in, fan_out):
        kw, kb = jax.random.split(k)
        bound = 1.0 / jnp.sqrt(fan_in)
        w = jax.random.uniform(kw, (fan_out, fan_in), jnp.float32, -bound, bound)
        b = jax.random.uniform(kb, (fan_out,), jnp.float32, -bound, bound)
        return w, b

    k1, k2, k3 = jax.random.split(key, 3)
    w1, b1 = linear(k1, state_length, H1)
    w2, b2 = linear(k2, H1, H2)
    w3, b3 = linear(k3, H2, action_length)
    return {
        "w1": w1, "b1": b1, "g1": jnp.ones((H1,), jnp.float32), "be1": jnp.zeros((H1,), jnp.float32),
        "w2": w2, "b2": b2, "g2": jnp.ones((H2,), jnp.float32), "be2": jnp.zeros((H2,), jnp.float32),
        "w3": w3, "b3": b3,
    }


def dqn_reference(x, p):
    """Pure-JAX reference of the same forward (training-mode BN), unfolded params."""
    h = x @ p["w1"].T + p["b1"]
    mu, var = h.mean(0), h.var(0)
    h = (h - mu) / jnp.sqrt(var + EPS) * p["g1"] + p["be1"]
    h = h @ p["w2"].T + p["b2"]
    mu, var = h.mean(0), h.var(0)
    h = (h - mu) / jnp.sqrt(var + EPS) * p["g2"] + p["be2"]
    return h @ p["w3"].T + p["b3"]
# TODO(synk): BatchNorm running_mean/running_var/num_batches_tracked updates are not
# produced (only the train-mode forward output is replicated).


if __name__ == "__main__":
    state_length, action_length = 32, 3
    key = jax.random.PRNGKey(0)
    k_x, k_p, k_xl = jax.random.split(key, 3)
    params = init_params(k_p, state_length, action_length)

    # ---- small batch: elementwise-normalize + VALU-reduction path ----
    B = 8
    x = jax.random.normal(k_x, (B, state_length), jnp.float32)
    ref = dqn_reference(x, params)

    prep_f32 = prepare_params(params, matmul_dtype=jnp.float32)   # exact-semantics check
    out = jax.block_until_ready(dqn_forward(x, prep_f32))
    assert out.shape == (B, action_length)
    assert jnp.allclose(out, ref, atol=1e-4, rtol=1e-4), "f32 kernel mismatch vs reference"

    prep_bf16 = prepare_params(params)                             # bf16 operands: default on all gens
    out_bf16 = jax.block_until_ready(dqn_forward(x, prep_bf16))
    assert out_bf16.shape == (B, action_length)
    assert jnp.all(jnp.isfinite(out_bf16))
    assert jnp.allclose(out_bf16, ref, atol=1e-1, rtol=1e-1), "bf16 kernel drifted too far"

    # ---- larger batch: BN folded into matmuls + MXU column-sum statistics ----
    BL = 512
    xl = jax.random.normal(k_xl, (BL, state_length), jnp.float32)
    refl = dqn_reference(xl, params)
    outl = jax.block_until_ready(dqn_forward(xl, prep_f32))
    assert outl.shape == (BL, action_length)
    assert jnp.allclose(outl, refl, atol=2e-3, rtol=2e-3), "f32 folded-BN kernel mismatch"

    outl_bf16 = jax.block_until_ready(dqn_forward(xl, prep_bf16, slice_output=False))
    assert outl_bf16.shape == (BL, prep_bf16["w3"].shape[1])       # padded, lane-dense output
    assert jnp.all(jnp.isfinite(outl_bf16))

    print("KERNEL_OK")
</pallas_src>

<mosaic_0001>
module attributes {stable_mosaic.version = 11 : i64} {
  func.func @kernel(%arg0: memref<8x128xf32, #tpu.memory_space<vmem>>, %arg1: memref<128x128xf32, #tpu.memory_space<vmem>>, %arg2: memref<1x128xf32, #tpu.memory_space<vmem>>, %arg3: memref<128x256xf32, #tpu.memory_space<vmem>>, %arg4: memref<1x256xf32, #tpu.memory_space<vmem>>, %arg5: memref<256x128xf32, #tpu.memory_space<vmem>>, %arg6: memref<1x128xf32, #tpu.memory_space<vmem>>, %arg7: memref<8x128xf32, #tpu.memory_space<vmem>>) attributes {dimension_semantics = [], scalar_prefetch = 0 : i64, scratch_operands = 0 : i64, tpu.core_type = #tpu.core_type<tc>} {
    %c0 = arith.constant 0 : index
    %c0_0 = arith.constant 0 : index
    %0 = vector.load %arg0[%c0, %c0_0] : memref<8x128xf32, #tpu.memory_space<vmem>>, vector<8x128xf32>
    %c0_1 = arith.constant 0 : index
    %c0_2 = arith.constant 0 : index
    %1 = vector.load %arg1[%c0_1, %c0_2] : memref<128x128xf32, #tpu.memory_space<vmem>>, vector<128x128xf32>
    %cst = arith.constant dense<0.000000e+00> : vector<8x128xf32>
    %2 = tpu.matmul %0, %1, %cst {dimension_numbers = #tpu.dot_dimension_numbers<[1], [0], [0], [1], [0, 0, 1, 1], [], []>} : vector<8x128xf32>, vector<128x128xf32>, vector<8x128xf32> -> vector<8x128xf32>
    %c0_3 = arith.constant 0 : index
    %c0_4 = arith.constant 0 : index
    %3 = vector.load %arg2[%c0_3, %c0_4] : memref<1x128xf32, #tpu.memory_space<vmem>>, vector<1x128xf32>
    %4 = vector.broadcast %3 : vector<1x128xf32> to vector<8x128xf32>
    %5 = arith.addf %2, %4 : vector<8x128xf32>
    %cst_5 = arith.constant dense<0.000000e+00> : vector<128xf32>
    %6 = vector.multi_reduction <add>, %5, %cst_5 [0] : vector<8x128xf32> to vector<128xf32>
    %7 = vector.shape_cast %6 : vector<128xf32> to vector<1x128xf32>
    %8 = arith.mulf %5, %5 : vector<8x128xf32>
    %cst_6 = arith.constant dense<0.000000e+00> : vector<128xf32>
    %9 = vector.multi_reduction <add>, %8, %cst_6 [0] : vector<8x128xf32> to vector<128xf32>
    %10 = vector.shape_cast %9 : vector<128xf32> to vector<1x128xf32>
    %cst_7 = arith.constant 1.250000e-01 : f32
    %11 = vector.broadcast %cst_7 : f32 to vector<1x128xf32>
    %12 = arith.mulf %7, %11 : vector<1x128xf32>
    %cst_8 = arith.constant 1.250000e-01 : f32
    %13 = vector.broadcast %cst_8 : f32 to vector<1x128xf32>
    %14 = arith.mulf %10, %13 : vector<1x128xf32>
    %15 = arith.mulf %12, %12 : vector<1x128xf32>
    %16 = arith.subf %14, %15 : vector<1x128xf32>
    %cst_9 = arith.constant 0.000000e+00 : f32
    %17 = vector.broadcast %cst_9 : f32 to vector<1x128xf32>
    %18 = arith.maximumf %16, %17 : vector<1x128xf32>
    %cst_10 = arith.constant 9.99999974E-6 : f32
    %19 = vector.broadcast %cst_10 : f32 to vector<1x128xf32>
    %20 = arith.addf %18, %19 : vector<1x128xf32>
    %21 = math.rsqrt %20 : vector<1x128xf32>
    %22 = vector.broadcast %12 : vector<1x128xf32> to vector<8x128xf32>
    %23 = arith.subf %5, %22 : vector<8x128xf32>
    %24 = vector.broadcast %21 : vector<1x128xf32> to vector<8x128xf32>
    %25 = arith.mulf %23, %24 : vector<8x128xf32>
    %c0_11 = arith.constant 0 : index
    %c0_12 = arith.constant 0 : index
    %26 = vector.load %arg3[%c0_11, %c0_12] : memref<128x256xf32, #tpu.memory_space<vmem>>, vector<128x256xf32>
    %cst_13 = arith.constant dense<0.000000e+00> : vector<8x256xf32>
    %27 = tpu.matmul %25, %26, %cst_13 {dimension_numbers = #tpu.dot_dimension_numbers<[1], [0], [0], [1], [0, 0, 1, 1], [], []>} : vector<8x128xf32>, vector<128x256xf32>, vector<8x256xf32> -> vector<8x256xf32>
    %c0_14 = arith.constant 0 : index
    %c0_15 = arith.constant 0 : index
    %28 = vector.load %arg4[%c0_14, %c0_15] : memref<1x256xf32, #tpu.memory_space<vmem>>, vector<1x256xf32>
    %29 = vector.broadcast %28 : vector<1x256xf32> to vector<8x256xf32>
    %30 = arith.addf %27, %29 : vector<8x256xf32>
    %cst_16 = arith.constant dense<0.000000e+00> : vector<256xf32>
    %31 = vector.multi_reduction <add>, %30, %cst_16 [0] : vector<8x256xf32> to vector<256xf32>
    %32 = vector.shape_cast %31 : vector<256xf32> to vector<1x256xf32>
    %33 = arith.mulf %30, %30 : vector<8x256xf32>
    %cst_17 = arith.constant dense<0.000000e+00> : vector<256xf32>
    %34 = vector.multi_reduction <add>, %33, %cst_17 [0] : vector<8x256xf32> to vector<256xf32>
    %35 = vector.shape_cast %34 : vector<256xf32> to vector<1x256xf32>
    %cst_18 = arith.constant 1.250000e-01 : f32
    %36 = vector.broadcast %cst_18 : f32 to vector<1x256xf32>
    %37 = arith.mulf %32, %36 : vector<1x256xf32>
    %cst_19 = arith.constant 1.250000e-01 : f32
    %38 = vector.broadcast %cst_19 : f32 to vector<1x256xf32>
    %39 = arith.mulf %35, %38 : vector<1x256xf32>
    %40 = arith.mulf %37, %37 : vector<1x256xf32>
    %41 = arith.subf %39, %40 : vector<1x256xf32>
    %cst_20 = arith.constant 0.000000e+00 : f32
    %42 = vector.broadcast %cst_20 : f32 to vector<1x256xf32>
    %43 = arith.maximumf %41, %42 : vector<1x256xf32>
    %cst_21 = arith.constant 9.99999974E-6 : f32
    %44 = vector.broadcast %cst_21 : f32 to vector<1x256xf32>
    %45 = arith.addf %43, %44 : vector<1x256xf32>
    %46 = math.rsqrt %45 : vector<1x256xf32>
    %47 = vector.broadcast %37 : vector<1x256xf32> to vector<8x256xf32>
    %48 = arith.subf %30, %47 : vector<8x256xf32>
    %49 = vector.broadcast %46 : vector<1x256xf32> to vector<8x256xf32>
    %50 = arith.mulf %48, %49 : vector<8x256xf32>
    %c0_22 = arith.constant 0 : index
    %c0_23 = arith.constant 0 : index
    %51 = vector.load %arg5[%c0_22, %c0_23] : memref<256x128xf32, #tpu.memory_space<vmem>>, vector<256x128xf32>
    %cst_24 = arith.constant dense<0.000000e+00> : vector<8x128xf32>
    %52 = tpu.matmul %50, %51, %cst_24 {dimension_numbers = #tpu.dot_dimension_numbers<[1], [0], [0], [1], [0, 0, 1, 1], [], []>} : vector<8x256xf32>, vector<256x128xf32>, vector<8x128xf32> -> vector<8x128xf32>
    %c0_25 = arith.constant 0 : index
    %c0_26 = arith.constant 0 : index
    %53 = vector.load %arg6[%c0_25, %c0_26] : memref<1x128xf32, #tpu.memory_space<vmem>>, vector<1x128xf32>
    %54 = vector.broadcast %53 : vector<1x128xf32> to vector<8x128xf32>
    %55 = arith.addf %52, %54 : vector<8x128xf32>
    %c0_27 = arith.constant 0 : index
    %c0_28 = arith.constant 0 : index
    %56 = vector.load %arg7[%c0_27, %c0_28] : memref<8x128xf32, #tpu.memory_space<vmem>>, vector<8x128xf32>
    tpu.vector_store %arg7[%c0_27, %c0_28], %55 {strides = array<i32>} : memref<8x128xf32, #tpu.memory_space<vmem>>, vector<8x128xf32>,
    return
  }
}

</mosaic_0001>

<llo_original>
// kernel: tpu_custom_call.1
$region0: #{tpu_custom_call.1}
  #allocation0 [shape = 'u32[]', space=smem, size = 0x4, offset = 0x4, fixed_abs, tag = 'smem constant byte address 0x4 - core index']
  #allocation1 [shape = 'u32[72,128]{1,0:T(1,128)}', space=vmem, size = 0x9000, scoped, tag = 'internal scratch']
  %s0 = inlined_call_operand.hbm [shape: f32[8,128], index: 0, kind: input, shape index: {}]
  %s1 = inlined_call_operand.hbm [shape: f32[128,128], index: 1, kind: input, shape index: {}]
  %s2 = inlined_call_operand.vmem [shape: f32[1,128], index: 2, kind: input, shape index: {}]
  %s3 = inlined_call_operand.hbm [shape: f32[128,256], index: 3, kind: input, shape index: {}]
  %s4 = inlined_call_operand.vmem [shape: f32[1,256], index: 4, kind: input, shape index: {}]
  %s5 = inlined_call_operand.hbm [shape: f32[256,128], index: 5, kind: input, shape index: {}]
  %s6 = inlined_call_operand.vmem [shape: f32[1,128], index: 6, kind: input, shape index: {}]
  %s7 = inlined_call_operand.hbm [shape: f32[8,128], index: 7, kind: output, shape index: {}]
  %s8 = sld [smem:[#allocation0]]
  $region54: #{tpu_custom_call.1} parent=0
    _
  %s10 = ssub.s32 1, %s8
  %s11 = scalar_select 0, %s10, %s8
  $region1: #{tpu_custom_call.1} parent=0
    #allocation2 [shape = 'u8[4096]{0}', space=vmem, size = 0x1000, scoped, tag = 'input window, operand 0, single buffered']
    #allocation3 [shape = 's32[1]{0}', space=sflag, size = 0x4, scoped, tag = 'scoped memory for tpu_custom_call.1']
    #allocation4 [shape = 's32[1]{0}', space=sflag, size = 0x4, scoped, tag = 'scoped memory for tpu_custom_call.1']
    #allocation5 [shape = 'u8[65536]{0}', space=vmem, size = 0x10000, scoped, tag = 'input window, operand 1, single buffered']
    #allocation6 [shape = 's32[1]{0}', space=sflag, size = 0x4, scoped, tag = 'scoped memory for tpu_custom_call.1']
    #allocation7 [shape = 'u8[131072]{0}', space=vmem, size = 0x20000, scoped, tag = 'input window, operand 3, single buffered']
    #allocation8 [shape = 'u8[131072]{0}', space=vmem, size = 0x20000, scoped, tag = 'input window, operand 5, single buffered']
    #allocation9 [shape = 's32[1]{0}', space=sflag, size = 0x4, scoped, tag = 'scoped memory for tpu_custom_call.1']
    #allocation10 [shape = 'u8[4096]{0}', space=vmem, size = 0x1000, scoped, tag = 'output window, operand 0, single buffered']
    %12 = vsyncpa [#allocation3], 0
    %13 = vsyncpa [#allocation6], 0
    %14 = vsyncpa [#allocation9], 0
    %15 = vsyncpa [#allocation4], 0
    // Predicated region
    $region2: #{tpu_custom_call.1} parent=1 // pred_check
      _
    $region3: #{tpu_custom_call.1} parent=1 // pred_check_branch
      %17 = sbr.rel (0) target = $region5
    $region4: #{tpu_custom_call.1} parent=1 // pred_region
      %19 = vsyncadd [#allocation3], 0
      %s21 = sshll.u32 %s0, 4
      %s22 = int_to_ptr.hbm [resolvable:$true] %s21
      %s23 = sshll.u32 [#allocation2], 4
      %s24 = int_to_ptr.vmem [resolvable:$true] %s23
      %26 = dma.hbm_to_vmem [thread:$0]  %s22, 128, %s24, [#allocation3]
    $region5: #{tpu_custom_call.1} parent=1 // pred_fallthru
      _
    // Predicated region
    $region6: #{tpu_custom_call.1} parent=1 // pred_check
      _
    $region7: #{tpu_custom_call.1} parent=1 // pred_check_branch
      %28 = sbr.rel (0) target = $region9
    $region8: #{tpu_custom_call.1} parent=1 // pred_region
      %30 = vsyncadd [#allocation6], 0
      %s31 = sshll.u32 %s1, 4
      %s32 = int_to_ptr.hbm [resolvable:$true] %s31
      %s33 = sshll.u32 [#allocation5], 4
      %s34 = int_to_ptr.vmem [resolvable:$true] %s33
      %39 = dma.hbm_to_vmem [thread:$0]  %s32, 2048, %s34, [#allocation6], 128, 128, 8
    $region9: #{tpu_custom_call.1} parent=1 // pred_fallthru
      _
    // Predicated region
    $region10: #{tpu_custom_call.1} parent=1 // pred_check
      _
    $region11: #{tpu_custom_call.1} parent=1 // pred_check_branch
      %41 = sbr.rel (0) target = $region13
    $region12: #{tpu_custom_call.1} parent=1 // pred_region
      _
    $region13: #{tpu_custom_call.1} parent=1 // pred_fallthru
      _
    // Predicated region
    $region14: #{tpu_custom_call.1} parent=1 // pred_check
      _
    $region15: #{tpu_custom_call.1} parent=1 // pred_check_branch
      %43 = sbr.rel (0) target = $region17
    $region16: #{tpu_custom_call.1} parent=1 // pred_region
      %45 = vsyncadd [#allocation6], 0
      %s46 = sshll.u32 %s3, 4
      %s47 = int_to_ptr.hbm [resolvable:$true] %s46
      %s48 = sshll.u32 [#allocation7], 4
      %s49 = int_to_ptr.vmem [resolvable:$true] %s48
      %54 = dma.hbm_to_vmem [thread:$0]  %s47, 4096, %s49, [#allocation6], 256, 256, 16
    $region17: #{tpu_custom_call.1} parent=1 // pred_fallthru
      _
    // Predicated region
    $region18: #{tpu_custom_call.1} parent=1 // pred_check
      _
    $region19: #{tpu_custom_call.1} parent=1 // pred_check_branch
      %56 = sbr.rel (0) target = $region21
    $region20: #{tpu_custom_call.1} parent=1 // pred_region
      _
    $region21: #{tpu_custom_call.1} parent=1 // pred_fallthru
      _
    // Predicated region
    $region22: #{tpu_custom_call.1} parent=1 // pred_check
      _
    $region23: #{tpu_custom_call.1} parent=1 // pred_check_branch
      %58 = sbr.rel (0) target = $region25
    $region24: #{tpu_custom_call.1} parent=1 // pred_region
      %60 = vsyncadd [#allocation9], 0
      %s61 = sshll.u32 %s5, 4
      %s62 = int_to_ptr.hbm [resolvable:$true] %s61
      %s63 = sshll.u32 [#allocation8], 4
      %s64 = int_to_ptr.vmem [resolvable:$true] %s63
      %69 = dma.hbm_to_vmem [thread:$0]  %s62, 4096, %s64, [#allocation9], 128, 128, 8
    $region25: #{tpu_custom_call.1} parent=1 // pred_fallthru
      _
    // Predicated region
    $region26: #{tpu_custom_call.1} parent=1 // pred_check
      _
    $region27: #{tpu_custom_call.1} parent=1 // pred_check_branch
      %71 = sbr.rel (0) target = $region29
    $region28: #{tpu_custom_call.1} parent=1 // pred_region
      _
    $region29: #{tpu_custom_call.1} parent=1 // pred_fallthru
      _
    // Predicated region
    $region30: #{tpu_custom_call.1} parent=1 // pred_check
      _
    $region31: #{tpu_custom_call.1} parent=1 // pred_check_branch
      %73 = sbr.rel (0) target = $region33
    $region32: #{tpu_custom_call.1} parent=1 // pred_region
      %75 = dma.done [#allocation3], 128
    $region33: #{tpu_custom_call.1} parent=1 // pred_fallthru
      _
    // Predicated region
    $region34: #{tpu_custom_call.1} parent=1 // pred_check
      _
    $region35: #{tpu_custom_call.1} parent=1 // pred_check_branch
      %77 = sbr.rel (0) target = $region37
    $region36: #{tpu_custom_call.1} parent=1 // pred_region
      %79 = dma.done [#allocation6], 2048
    $region37: #{tpu_custom_call.1} parent=1 // pred_fallthru
      _
    // Predicated region
    $region38: #{tpu_custom_call.1} parent=1 // pred_check
      _
    $region39: #{tpu_custom_call.1} parent=1 // pred_check_branch
      %81 = sbr.rel (0) target = $region41
    $region40: #{tpu_custom_call.1} parent=1 // pred_region
      %83 = dma.done [#allocation6], 4096
    $region41: #{tpu_custom_call.1} parent=1 // pred_fallthru
      _
    // Predicated region
    $region42: #{tpu_custom_call.1} parent=1 // pred_check
      _
    $region43: #{tpu_custom_call.1} parent=1 // pred_check_branch
      %85 = sbr.rel (0) target = $region45
    $region44: #{tpu_custom_call.1} parent=1 // pred_region
      %87 = dma.done [#allocation9], 4096
    $region45: #{tpu_custom_call.1} parent=1 // pred_fallthru
      _
    %v88 = vld [vmem:[#allocation2] sm:$0xff]
    %v89 = vld [vmem:[#allocation5] sm:$0xff]
    %v90 = vld [vmem:[#allocation5 + $0x8] sm:$0xff]
    %v91 = vld [vmem:[#allocation5 + $0x10] sm:$0xff]
    %v92 = vld [vmem:[#allocation5 + $0x18] sm:$0xff]
    %v93 = vld [vmem:[#allocation5 + $0x20] sm:$0xff]
    %v94 = vld [vmem:[#allocation5 + $0x28] sm:$0xff]
    %v95 = vld [vmem:[#allocation5 + $0x30] sm:$0xff]
    %v96 = vld [vmem:[#allocation5 + $0x38] sm:$0xff]
    %v97 = vld [vmem:[#allocation5 + $0x40] sm:$0xff]
    %v98 = vld [vmem:[#allocation5 + $0x48] sm:$0xff]
    %v99 = vld [vmem:[#allocation5 + $0x50] sm:$0xff]
    %v100 = vld [vmem:[#allocation5 + $0x58] sm:$0xff]
    %v101 = vld [vmem:[#allocation5 + $0x60] sm:$0xff]
    %v102 = vld [vmem:[#allocation5 + $0x68] sm:$0xff]
    %v103 = vld [vmem:[#allocation5 + $0x70] sm:$0xff]
    %v104 = vld [vmem:[#allocation5 + $0x78] sm:$0xff]
    %v105 = vld [vmem:[%s2] sm:$0x1]
    %v107 = vperm.slane %v105, 0
    %109 = vmatpush.msra.mxu0 %v104
    %110 = vmatpush.msra.mxu0 %v103
    %111 = vmatpush.msra.mxu0 %v102
    %112 = vmatpush.msra.mxu0 %v101
    %113 = vmatpush.msra.mxu0 %v100
    %114 = vmatpush.msra.mxu0 %v99
    %115 = vmatpush.msra.mxu0 %v98
    %116 = vmatpush.msra.mxu0 %v97
    %117 = vmatpush.msra.mxu0 %v96
    %118 = vmatpush.msra.mxu0 %v95
    %119 = vmatpush.msra.mxu0 %v94
    %120 = vmatpush.msra.mxu0 %v93
    %121 = vmatpush.msra.mxu0 %v92
    %122 = vmatpush.msra.mxu0 %v91
    %123 = vmatpush.msra.mxu0 %v90
    %124 = vmatpush.msra.mxu0 %v89
    %125 = vmatmul.f32.gmra.mxu0 %v88
    %v126 = vpop.f32.mrf.mxu0
    %v127 = vadd.f32 %v107, %v126
    %128 = vdwg.mxu0
    %v129 = vrot.slane %v127, 4
    %v130 = vadd.f32 %v127, %v129
    %v131 = vrot.slane %v130, 2
    %v132 = vadd.f32 %v130, %v131
    %v133 = vrot.slane %v132, 1
    %v134 = vadd.f32 %v132, %v133
    %v135 = vmul.f32 %v127, %v127
    %v136 = vrot.slane %v135, 4
    %v137 = vadd.f32 %v135, %v136
    %v138 = vrot.slane %v137, 2
    %v139 = vadd.f32 %v137, %v138
    %v140 = vrot.slane %v139, 1
    %v141 = vadd.f32 %v139, %v140
    %v142 = vmul.f32 %v134, 0.125
    %v143 = vmul.f32 %v141, 0.125
    %v144 = vmul.f32 %v142, %v142
    %v145 = vsub.f32 %v143, %v144
    %v146 = vmax.f32 %v145, 0.0
    %v147 = vadd.f32 %v146, 1e-05
    %v148 = vrsqrt.pop %v147
    %v149 = vmul.f32 %v148, %v147
    %v150 = vmul.f32 %v149, %v148
    %v151 = vmul.f32 0.5, %v150
    %v152 = vsub.f32 1.5, %v151
    %v153 = vmul.f32 %v148, %v152
    %vm154 = vweird.f32 %v147
    %vm155 = vweird.f32 %v148
    %vm156 = vmor %vm154, %vm155
    %v157 = vsel %vm156, %v148, %v153
    %v158 = vsub.f32 %v127, %v142
    %v159 = vmul.f32 %v158, %v157
    %v160 = vld [vmem:[#allocation7] sm:$0xff]
    %v161 = vld [vmem:[#allocation7 + $0x8] sm:$0xff]
    %v162 = vld [vmem:[#allocation7 + $0x10] sm:$0xff]
    %v163 = vld [vmem:[#allocation7 + $0x18] sm:$0xff]
    %v164 = vld [vmem:[#allocation7 + $0x20] sm:$0xff]
    %v165 = vld [vmem:[#allocation7 + $0x28] sm:$0xff]
    %v166 = vld [vmem:[#allocation7 + $0x30] sm:$0xff]
    %v167 = vld [vmem:[#allocation7 + $0x38] sm:$0xff]
    %v168 = vld [vmem:[#allocation7 + $0x40] sm:$0xff]
    %v169 = vld [vmem:[#allocation7 + $0x48] sm:$0xff]
    %v170 = vld [vmem:[#allocation7 + $0x50] sm:$0xff]
    %v171 = vld [vmem:[#allocation7 + $0x58] sm:$0xff]
    %v172 = vld [vmem:[#allocation7 + $0x60] sm:$0xff]
    %v173 = vld [vmem:[#allocation7 + $0x68] sm:$0xff]
    %v174 = vld [vmem:[#allocation7 + $0x70] sm:$0xff]
    %v175 = vld [vmem:[#allocation7 + $0x78] sm:$0xff]
    %v176 = vld [vmem:[#allocation7 + $0x80] sm:$0xff]
    %v177 = vld [vmem:[#allocation7 + $0x88] sm:$0xff]
    %v178 = vld [vmem:[#allocation7 + $0x90] sm:$0xff]
    %v179 = vld [vmem:[#allocation7 + $0x98] sm:$0xff]
    %v180 = vld [vmem:[#allocation7 + $0xa0] sm:$0xff]
    %v181 = vld [vmem:[#allocation7 + $0xa8] sm:$0xff]
    %v182 = vld [vmem:[#allocation7 + $0xb0] sm:$0xff]
    %v183 = vld [vmem:[#allocation7 + $0xb8] sm:$0xff]
    %v184 = vld [vmem:[#allocation7 + $0xc0] sm:$0xff]
    %v185 = vld [vmem:[#allocation7 + $0xc8] sm:$0xff]
    %v186 = vld [vmem:[#allocation7 + $0xd0] sm:$0xff]
    %v187 = vld [vmem:[#allocation7 + $0xd8] sm:$0xff]
    %v188 = vld [vmem:[#allocation7 + $0xe0] sm:$0xff]
    %v189 = vld [vmem:[#allocation7 + $0xe8] sm:$0xff]
    %v190 = vld [vmem:[#allocation7 + $0xf0] sm:$0xff]
    %v191 = vld [vmem:[#allocation7 + $0xf8] sm:$0xff]
    %v192 = vld [vmem:[%s4] sm:$0x3]
    %v194 = vperm.slane %v192, 0
    %v195 = vperm.slane %v192, 1
    %198 = vmatpush.msra.mxu0 %v190
    %199 = vmatpush.msra.mxu0 %v188
    %200 = vmatpush.msra.mxu0 %v186
    %201 = vmatpush.msra.mxu0 %v184
    %202 = vmatpush.msra.mxu0 %v182
    %203 = vmatpush.msra.mxu0 %v180
    %204 = vmatpush.msra.mxu0 %v178
    %205 = vmatpush.msra.mxu0 %v176
    %206 = vmatpush.msra.mxu0 %v174
    %207 = vmatpush.msra.mxu0 %v172
    %208 = vmatpush.msra.mxu0 %v170
    %209 = vmatpush.msra.mxu0 %v168
    %210 = vmatpush.msra.mxu0 %v166
    %211 = vmatpush.msra.mxu0 %v164
    %212 = vmatpush.msra.mxu0 %v162
    %213 = vmatpush.msra.mxu0 %v160
    %214 = vmatmul.f32.gmra.mxu0 %v159
    %v215 = vpop.f32.mrf.mxu0
    %v216 = vadd.f32 %v194, %v215
    %217 = vdwg.mxu0
    %218 = vmatpush.msra.mxu0 %v191
    %219 = vmatpush.msra.mxu0 %v189
    %220 = vmatpush.msra.mxu0 %v187
    %221 = vmatpush.msra.mxu0 %v185
    %222 = vmatpush.msra.mxu0 %v183
    %223 = vmatpush.msra.mxu0 %v181
    %224 = vmatpush.msra.mxu0 %v179
    %225 = vmatpush.msra.mxu0 %v177
    %226 = vmatpush.msra.mxu0 %v175
    %227 = vmatpush.msra.mxu0 %v173
    %228 = vmatpush.msra.mxu0 %v171
    %229 = vmatpush.msra.mxu0 %v169
    %230 = vmatpush.msra.mxu0 %v167
    %231 = vmatpush.msra.mxu0 %v165
    %232 = vmatpush.msra.mxu0 %v163
    %233 = vmatpush.msra.mxu0 %v161
    %234 = vmatmul.f32.gmra.mxu0 %v159
    %v235 = vpop.f32.mrf.mxu0
    %v236 = vadd.f32 %v195, %v235
    %237 = vdwg.mxu0
    %v238 = vrot.slane %v216, 4
    %v239 = vadd.f32 %v216, %v238
    %v240 = vrot.slane %v239, 2
    %v241 = vadd.f32 %v239, %v240
    %v242 = vrot.slane %v241, 1
    %v243 = vadd.f32 %v241, %v242
    %v244 = vrot.slane %v236, 4
    %v245 = vadd.f32 %v236, %v244
    %v246 = vrot.slane %v245, 2
    %v247 = vadd.f32 %v245, %v246
    %v248 = vrot.slane %v247, 1
    %v249 = vadd.f32 %v247, %v248
    %v250 = vmul.f32 %v216, %v216
    %v251 = vmul.f32 %v236, %v236
    %v252 = vrot.slane %v250, 4
    %v253 = vadd.f32 %v250, %v252
    %v254 = vrot.slane %v253, 2
    %v255 = vadd.f32 %v253, %v254
    %v256 = vrot.slane %v255, 1
    %v257 = vadd.f32 %v255, %v256
    %v258 = vrot.slane %v251, 4
    %v259 = vadd.f32 %v251, %v258
    %v260 = vrot.slane %v259, 2
    %v261 = vadd.f32 %v259, %v260
    %v262 = vrot.slane %v261, 1
    %v263 = vadd.f32 %v261, %v262
    %v264 = vmul.f32 %v243, 0.125
    %v265 = vmul.f32 %v249, 0.125
    %v266 = vmul.f32 %v257, 0.125
    %v267 = vmul.f32 %v263, 0.125
    %v268 = vmul.f32 %v264, %v264
    %v269 = vmul.f32 %v265, %v265
    %v270 = vsub.f32 %v266, %v268
    %v271 = vsub.f32 %v267, %v269
    %v272 = vmax.f32 %v270, 0.0
    %v273 = vmax.f32 %v271, 0.0
    %v274 = vadd.f32 %v272, 1e-05
    %v275 = vadd.f32 %v273, 1e-05
    %v276 = vrsqrt.pop %v274
    %v277 = vmul.f32 %v276, %v274
    %v278 = vmul.f32 %v277, %v276
    %v279 = vmul.f32 0.5, %v278
    %v280 = vsub.f32 1.5, %v279
    %v281 = vmul.f32 %v276, %v280
    %vm282 = vweird.f32 %v274
    %vm283 = vweird.f32 %v276
    %vm284 = vmor %vm282, %vm283
    %v285 = vsel %vm284, %v276, %v281
    %v286 = vrsqrt.pop %v275
    %v287 = vmul.f32 %v286, %v275
    %v288 = vmul.f32 %v287, %v286
    %v289 = vmul.f32 0.5, %v288
    %v290 = vsub.f32 1.5, %v289
    %v291 = vmul.f32 %v286, %v290
    %vm292 = vweird.f32 %v275
    %vm293 = vweird.f32 %v286
    %vm294 = vmor %vm292, %vm293
    %v295 = vsel %vm294, %v286, %v291
    %v296 = vsub.f32 %v216, %v264
    %v297 = vsub.f32 %v236, %v265
    %v298 = vmul.f32 %v296, %v285
    %v299 = vmul.f32 %v297, %v295
    %v300 = vld [vmem:[#allocation8] sm:$0xff]
    %v301 = vld [vmem:[#allocation8 + $0x8] sm:$0xff]
    %v302 = vld [vmem:[#allocation8 + $0x10] sm:$0xff]
    %v303 = vld [vmem:[#allocation8 + $0x18] sm:$0xff]
    %v304 = vld [vmem:[#allocation8 + $0x20] sm:$0xff]
    %v305 = vld [vmem:[#allocation8 + $0x28] sm:$0xff]
    %v306 = vld [vmem:[#allocation8 + $0x30] sm:$0xff]
    %v307 = vld [vmem:[#allocation8 + $0x38] sm:$0xff]
    %v308 = vld [vmem:[#allocation8 + $0x40] sm:$0xff]
    %v309 = vld [vmem:[#allocation8 + $0x48] sm:$0xff]
    %v310 = vld [vmem:[#allocation8 + $0x50] sm:$0xff]
    %v311 = vld [vmem:[#allocation8 + $0x58] sm:$0xff]
    %v312 = vld [vmem:[#allocation8 + $0x60] sm:$0xff]
    %v313 = vld [vmem:[#allocation8 + $0x68] sm:$0xff]
    %v314 = vld [vmem:[#allocation8 + $0x70] sm:$0xff]
    %v315 = vld [vmem:[#allocation8 + $0x78] sm:$0xff]
    %v316 = vld [vmem:[#allocation8 + $0x80] sm:$0xff]
    %v317 = vld [vmem:[#allocation8 + $0x88] sm:$0xff]
    %v318 = vld [vmem:[#allocation8 + $0x90] sm:$0xff]
    %v319 = vld [vmem:[#allocation8 + $0x98] sm:$0xff]
    %v320 = vld [vmem:[#allocation8 + $0xa0] sm:$0xff]
    %v321 = vld [vmem:[#allocation8 + $0xa8] sm:$0xff]
    %v322 = vld [vmem:[#allocation8 + $0xb0] sm:$0xff]
    %v323 = vld [vmem:[#allocation8 + $0xb8] sm:$0xff]
    %v324 = vld [vmem:[#allocation8 + $0xc0] sm:$0xff]
    %v325 = vld [vmem:[#allocation8 + $0xc8] sm:$0xff]
    %v326 = vld [vmem:[#allocation8 + $0xd0] sm:$0xff]
    %v327 = vld [vmem:[#allocation8 + $0xd8] sm:$0xff]
    %v328 = vld [vmem:[#allocation8 + $0xe0] sm:$0xff]
    %v329 = vld [vmem:[#allocation8 + $0xe8] sm:$0xff]
    %v330 = vld [vmem:[#allocation8 + $0xf0] sm:$0xff]
    %v331 = vld [vmem:[#allocation8 + $0xf8] sm:$0xff]
    %v332 = vld [vmem:[%s6] sm:$0x1]
    %v334 = vperm.slane %v332, 0
    %336 = vmatpush.msra.mxu0 %v315
    %337 = vmatpush.msra.mxu0 %v314
    %338 = vmatpush.msra.mxu0 %v313
    %339 = vmatpush.msra.mxu0 %v312
    %340 = vmatpush.msra.mxu0 %v311
    %341 = vmatpush.msra.mxu0 %v310
    %342 = vmatpush.msra.mxu0 %v309
    %343 = vmatpush.msra.mxu0 %v308
    %344 = vmatpush.msra.mxu0 %v307
    %345 = vmatpush.msra.mxu0 %v306
    %346 = vmatpush.msra.mxu0 %v305
    %347 = vmatpush.msra.mxu0 %v304
    %348 = vmatpush.msra.mxu0 %v303
    %349 = vmatpush.msra.mxu0 %v302
    %350 = vmatpush.msra.mxu0 %v301
    %351 = vmatpush.msra.mxu0 %v300
    %352 = vmatmul.f32.gmra.mxu0 %v298
    %v353 = vpop.f32.mrf.mxu0
    %v354 = vadd.f32 %v334, %v353
    %355 = vdwg.mxu0
    %356 = vmatpush.msra.mxu0 %v331
    %357 = vmatpush.msra.mxu0 %v330
    %358 = vmatpush.msra.mxu0 %v329
    %359 = vmatpush.msra.mxu0 %v328
    %360 = vmatpush.msra.mxu0 %v327
    %361 = vmatpush.msra.mxu0 %v326
    %362 = vmatpush.msra.mxu0 %v325
    %363 = vmatpush.msra.mxu0 %v324
    %364 = vmatpush.msra.mxu0 %v323
    %365 = vmatpush.msra.mxu0 %v322
    %366 = vmatpush.msra.mxu0 %v321
    %367 = vmatpush.msra.mxu0 %v320
    %368 = vmatpush.msra.mxu0 %v319
    %369 = vmatpush.msra.mxu0 %v318
    %370 = vmatpush.msra.mxu0 %v317
    %371 = vmatpush.msra.mxu0 %v316
    %372 = vmatmul.f32.gmra.mxu0 %v299
    %v373 = vpop.f32.mrf.mxu0
    %v374 = vadd.f32 %v354, %v373
    %375 = vdwg.mxu0
    %376 = vst [vmem:[#allocation10] sm:$0xff] %v374
    // Predicated region
    $region46: #{tpu_custom_call.1} parent=1 // pred_check
      _
    $region47: #{tpu_custom_call.1} parent=1 // pred_check_branch
      %378 = sbr.rel (0) target = $region49
    $region48: #{tpu_custom_call.1} parent=1 // pred_region
      %380 = vsyncadd [#allocation4], 0
      %s382 = sshll.u32 [#allocation10], 4
      %s383 = int_to_ptr.vmem [resolvable:$true] %s382
      %s384 = sshll.u32 %s7, 4
      %s385 = int_to_ptr.hbm [resolvable:$true] %s384
      %387 = dma.vmem_to_hbm [thread:$0]  %s383, 128, %s385, [#allocation4]
    $region49: #{tpu_custom_call.1} parent=1 // pred_fallthru
      _
    // Predicated region
    $region50: #{tpu_custom_call.1} parent=1 // pred_check
      _
    $region51: #{tpu_custom_call.1} parent=1 // pred_check_branch
      %389 = sbr.rel (0) target = $region53
    $region52: #{tpu_custom_call.1} parent=1 // pred_region
      %391 = dma.done [#allocation4], 128
    $region53: #{tpu_custom_call.1} parent=1 // pred_fallthru
      _
    %392 = vsyncpa [#allocation3], 1
    %393 = vsyncpa [#allocation6], 1
    %394 = vsyncpa [#allocation9], 1
    %395 = vsyncpa [#allocation4], 1

</llo_original>
